<compile_context>
chip_gen: v7x
topology: tpu7x:2x2x1
jax: 0.10.0
libtpu: 0.0.40
codegen_flags: <defaults>
</compile_context>

<pallas_src>
import math

import numpy as np
import jax
import jax.numpy as jnp
from jax import lax
from jax.experimental import pallas as pl
from jax.experimental.pallas import tpu as pltpu


def _round_up(x, m):
    return ((x + m - 1) // m) * m


# ---------------------------------------------------------------------------
# Pallas kernel: one edge block per grid step (flat grouped grid).
# ---------------------------------------------------------------------------
def _sage_kernel(blk_tile_ref, blk_first_ref, blk_last_ref,        # scalar prefetch (SMEM)
                 m_ref, dst_ref, xn_ref, invdeg_ref,
                 wan_ref, wah_ref, bapp_ref,
                 out_ref, acc_ref, rows_ref):
    b = pl.program_id(0)

    # Hoisted iota: build the (TN, TE) row-index plane once; it persists in scratch.
    @pl.when(b == 0)
    def _rows_init():
        rows_ref[...] = lax.broadcasted_iota(jnp.int32, rows_ref.shape, 0)

    # First block of this node tile: reset the accumulator.
    @pl.when(blk_first_ref[b] == 1)
    def _init():
        acc_ref[...] = jnp.zeros_like(acc_ref)

    # One-hot scatter of this block's (precomputed, bias-included) messages into the
    # node tile: sel[n, e] = 1 iff local dst(e) == n.  Pad slots carry the sentinel
    # local id TN and zero message rows, so they contribute nothing.
    sel = (rows_ref[...] == dst_ref[0]).astype(jnp.bfloat16)                  # [TN, TE]
    acc_ref[...] += jnp.dot(sel, m_ref[...],
                            preferred_element_type=jnp.float32)               # [TN, Dp] f32

    # Last block of this node tile: mean (1/deg in f32), apply GEMM (bf16 MXU, f32 acc),
    # bias + ReLU in f32, lane-dense bf16 store.
    @pl.when(blk_last_ref[b] == 1)
    def _finalize():
        h_neigh = acc_ref[...] * invdeg_ref[...]                              # [TN, Dp] f32
        z = (jnp.dot(xn_ref[...], wan_ref[...],
                     preferred_element_type=jnp.float32)
             + jnp.dot(h_neigh.astype(jnp.bfloat16), wah_ref[...],
                       preferred_element_type=jnp.float32)
             + bapp_ref[...])
        out_ref[...] = jnp.maximum(z, 0.0).astype(out_ref.dtype)


# ---------------------------------------------------------------------------
# Host-side, ONCE-per-graph index prep: sort by dst, align edge blocks to node
# tiles (pad each tile's edge range to a multiple of TE), per-block tile/first/last
# flags, per-edge gather indices, 1/deg.  O(E log E + N) ints, no dense matrices.
# ---------------------------------------------------------------------------
def prepare_graph(src, dst, num_nodes, *, node_tile=128, edge_tile=1024):
    src_np = np.asarray(jax.device_get(src), np.int64)
    dst_np = np.asarray(jax.device_get(dst), np.int64)
    E = int(dst_np.shape[0])
    N = int(num_nodes)

    TN = min(node_tile, _round_up(max(N, 1), 8))
    TE = min(edge_tile, _round_up(max(E, 1), 8))
    N_pad = _round_up(N, TN)
    NI = N_pad // TN

    order = np.argsort(dst_np, kind="stable")
    dst_sorted = dst_np[order]

    tile_starts = np.arange(NI + 1, dtype=np.int64) * TN
    bounds = np.searchsorted(dst_sorted, tile_starts, side="left")            # [NI+1]
    counts = bounds[1:] - bounds[:-1]                                         # edges / tile
    nblk = np.maximum(1, -(-counts // TE)).astype(np.int64)                   # >=1 block/tile
    NB = int(nblk.sum())
    E_tot = NB * TE

    blk_tile = np.repeat(np.arange(NI, dtype=np.int32), nblk)
    blk_pos = np.concatenate([np.arange(n, dtype=np.int32) for n in nblk])
    blk_first = (blk_pos == 0).astype(np.int32)
    blk_last = (blk_pos == np.repeat((nblk - 1).astype(np.int32), nblk)).astype(np.int32)

    blk_start = np.concatenate([[0], np.cumsum(nblk)]).astype(np.int64)       # blocks before tile i
    gather_idx = np.full((E_tot,), E, np.int32)        # E -> appended zero message row
    dst_local = np.full((E_tot,), TN, np.int32)        # sentinel: matches no row in [0, TN)
    for i in range(NI):
        f, l = int(bounds[i]), int(bounds[i + 1])
        cnt = l - f
        s = int(blk_start[i]) * TE
        gather_idx[s:s + cnt] = order[f:l].astype(np.int32)
        dst_local[s:s + cnt] = (dst_sorted[f:l] - i * TN).astype(np.int32)

    deg = np.zeros((N,), np.float64)
    np.add.at(deg, dst_np, 1.0)
    inv_deg = np.ones((N_pad, 1), np.float32)
    inv_deg[:N, 0] = (1.0 / np.maximum(deg, 1.0)).astype(np.float32)

    return {
        "blk_tile": jnp.asarray(blk_tile),
        "blk_first": jnp.asarray(blk_first),
        "blk_last": jnp.asarray(blk_last),
        "gather_idx": jnp.asarray(gather_idx),
        "dst_local": jnp.asarray(dst_local.reshape(NB, 1, TE)),
        "inv_deg": jnp.asarray(inv_deg),
        "src": jnp.asarray(src_np.astype(np.int32)),
        "N": N, "E": E, "N_pad": N_pad, "TN": TN, "TE": TE, "NB": NB, "NI": NI,
    }


# ---------------------------------------------------------------------------
# Forward: cheap XLA feature prep (gather + message GEMM + permute/pad) and the
# fused segment-mean + apply + ReLU Pallas kernel.
# ---------------------------------------------------------------------------
def sage_layer_forward(nfeats, efeats, graph, params):
    """nfeats [N,1,Din], efeats [E,1,De]  -> [N,1,Dout] float32."""
    N, _, Din = nfeats.shape
    E, _, De = efeats.shape
    Dout = params["b_apply"].shape[-1]
    # Lane-dense message / output width.  (On v6e/v7x with Dout > 128, round to 256
    # instead to fill the 256-wide MXU; on v5e keep 128.)
    Dp = 128 if Dout <= 128 else _round_up(Dout, 256)

    TN, TE, NB, N_pad = graph["TN"], graph["TE"], graph["NB"], graph["N_pad"]
    assert graph["N"] == N and graph["E"] == E

    x_n = nfeats.reshape(N, Din).astype(jnp.bfloat16)
    x_e = efeats.reshape(E, De).astype(jnp.bfloat16)

    # ---- weights: pad output dim to Dp (zero columns), bf16 for the MXU, biases f32.
    w_msg, w_app = params["w_msg"], params["w_apply"]
    wmsg_p = jnp.zeros((Din + De, Dp), jnp.float32).at[:, :Dout].set(w_msg).astype(jnp.bfloat16)
    bmsg_p = jnp.zeros((Dp,), jnp.float32).at[:Dout].set(params["b_msg"])
    wan_p = jnp.zeros((Din, Dp), jnp.float32).at[:, :Dout].set(w_app[:Din]).astype(jnp.bfloat16)
    wah_p = jnp.zeros((Dp, Dp), jnp.float32).at[:Dout, :Dout].set(w_app[Din:]).astype(jnp.bfloat16)
    bapp_p = jnp.zeros((1, Dp), jnp.float32).at[0, :Dout].set(params["b_apply"])

    # ---- XLA pre-pass: per-edge messages (bias included; exact for the mean since
    # mean(m+b) = mean(m)+b when deg>0, and padded slots are zero rows blocked by the
    # sentinel dst id).  Then permute into the per-tile padded edge layout.
    xcat = jnp.concatenate([jnp.take(x_n, graph["src"], axis=0), x_e], axis=1)
    m = jnp.dot(xcat, wmsg_p, preferred_element_type=jnp.float32) + bmsg_p[None, :]
    m = m.astype(jnp.bfloat16)                                                 # [E, Dp]
    m_pad = jnp.take(jnp.concatenate([m, jnp.zeros((1, Dp), jnp.bfloat16)], axis=0),
                     graph["gather_idx"], axis=0)                              # [NB*TE, Dp]

    xn_b = jnp.pad(x_n, ((0, N_pad - N), (0, 0)))                              # [N_pad, Din]

    grid_spec = pltpu.PrefetchScalarGridSpec(
        num_scalar_prefetch=3,
        grid=(NB,),
        in_specs=[
            pl.BlockSpec((TE, Dp), lambda b, t, f, l: (b, 0)),       # messages (bf16)
            pl.BlockSpec((1, 1, TE), lambda b, t, f, l: (b, 0, 0)),  # local dst ids (i32)
            pl.BlockSpec((TN, Din), lambda b, t, f, l: (t[b], 0)),   # node features (bf16)
            pl.BlockSpec((TN, 1), lambda b, t, f, l: (t[b], 0)),     # 1/max(deg,1)  (f32)
            pl.BlockSpec((Din, Dp), lambda b, t, f, l: (0, 0)),      # W_apply node part (bf16)
            pl.BlockSpec((Dp, Dp), lambda b, t, f, l: (0, 0)),       # W_apply neigh part (bf16)
            pl.BlockSpec((1, Dp), lambda b, t, f, l: (0, 0)),        # b_apply (f32)
        ],
        out_specs=pl.BlockSpec((TN, Dp), lambda b, t, f, l: (t[b], 0)),
        scratch_shapes=[pltpu.VMEM((TN, Dp), jnp.float32),           # accumulator
                        pltpu.VMEM((TN, TE), jnp.int32)],            # hoisted row-id plane
    )

    out = pl.pallas_call(
        _sage_kernel,
        out_shape=jax.ShapeDtypeStruct((N_pad, Dp), jnp.bfloat16),
        grid_spec=grid_spec,
        compiler_params=pltpu.CompilerParams(
            dimension_semantics=("arbitrary",),        # sequential accumulation over blocks
            vmem_limit_bytes=32 * 1024 * 1024),        # tiny working set; safe on v7x 64 MiB
    )(graph["blk_tile"], graph["blk_first"], graph["blk_last"],
      m_pad, graph["dst_local"], xn_b, graph["inv_deg"],
      wan_p, wah_p, bapp_p)

    return out[:N, :Dout].astype(jnp.float32).reshape(N, 1, Dout)


# ---------------------------------------------------------------------------
# Parameters matching nn.Linear shapes (uniform +-1/sqrt(fan_in)); weights stored
# transposed so the forward is x @ W.
# ---------------------------------------------------------------------------
def init_params(key, ndim_in, edims, ndim_out):
    k_msg = 1.0 / math.sqrt(ndim_in + edims)
    k_app = 1.0 / math.sqrt(ndim_in + ndim_out)
    ks = jax.random.split(key, 4)
    return {
        "w_msg": jax.random.uniform(ks[0], (ndim_in + edims, ndim_out),
                                    minval=-k_msg, maxval=k_msg, dtype=jnp.float32),
        "b_msg": jax.random.uniform(ks[1], (ndim_out,),
                                    minval=-k_msg, maxval=k_msg, dtype=jnp.float32),
        "w_apply": jax.random.uniform(ks[2], (ndim_in + ndim_out, ndim_out),
                                      minval=-k_app, maxval=k_app, dtype=jnp.float32),
        "b_apply": jax.random.uniform(ks[3], (ndim_out,),
                                      minval=-k_app, maxval=k_app, dtype=jnp.float32),
    }


# ---------------------------------------------------------------------------
# Reference: mirrors the DGL SAGELayer forward in f32 numpy, with bf16 rounding
# inserted at the points where the kernel path casts for the MXU, so the test
# tightly validates the gather / scatter / mean / tiling data path.  The kernel
# additionally emits its output in bf16 (lane-dense), so the comparison tolerance
# is ~1 bf16 ulp at |z| = O(1).
# ---------------------------------------------------------------------------
def _bf16_round(x):
    return np.asarray(
        jax.device_get(jnp.asarray(x, jnp.float32).astype(jnp.bfloat16).astype(jnp.float32)),
        np.float32)


def sage_layer_reference(nfeats, efeats, src, dst, params):
    N, _, Din = nfeats.shape
    E = efeats.shape[0]
    x_n = _bf16_round(np.asarray(jax.device_get(nfeats), np.float32).reshape(N, Din))
    x_e = _bf16_round(np.asarray(jax.device_get(efeats), np.float32).reshape(E, -1))
    src_np = np.asarray(jax.device_get(src))
    dst_np = np.asarray(jax.device_get(dst))
    w_msg = _bf16_round(params["w_msg"])
    w_app = _bf16_round(params["w_apply"])
    b_msg = np.asarray(jax.device_get(params["b_msg"]), np.float32)
    b_app = np.asarray(jax.device_get(params["b_apply"]), np.float32)

    m = np.concatenate([x_n[src_np], x_e], axis=1) @ w_msg + b_msg[None, :]
    m = _bf16_round(m)                                   # kernel feeds bf16 m to the scatter
    sums = np.zeros((N, m.shape[1]), np.float32)
    np.add.at(sums, dst_np, m)
    deg = np.zeros((N,), np.float32)
    np.add.at(deg, dst_np, 1.0)
    h_neigh = sums * (1.0 / np.maximum(deg, 1.0))[:, None]
    z = x_n @ w_app[:Din] + _bf16_round(h_neigh) @ w_app[Din:] + b_app[None, :]
    return np.maximum(z, 0.0).reshape(N, 1, -1).astype(np.float32)


if __name__ == "__main__":
    # Small synthetic graph consistent with the module's forward.
    N, E = 50, 250
    ndim_in, edims, ndim_out = 16, 8, 32

    key = jax.random.PRNGKey(0)
    k_n, k_e, k_s, k_d, k_p = jax.random.split(key, 5)
    nfeats = jax.random.normal(k_n, (N, 1, ndim_in), dtype=jnp.float32)
    efeats = jax.random.normal(k_e, (E, 1, edims), dtype=jnp.float32)
    src = jax.random.randint(k_s, (E,), 0, N, dtype=jnp.int32)
    dst = jax.random.randint(k_d, (E,), 0, N, dtype=jnp.int32)
    params = init_params(k_p, ndim_in, edims, ndim_out)

    # Small tiles so the test exercises multiple node tiles, multi-block reductions and
    # per-tile edge padding (production defaults: node_tile=128, edge_tile=1024).
    graph = prepare_graph(src, dst, N, node_tile=16, edge_tile=64)
    out = sage_layer_forward(nfeats, efeats, graph, params)
    out = jax.block_until_ready(out)

    ref = sage_layer_reference(nfeats, efeats, src, dst, params)
    assert out.shape == (N, 1, ndim_out)
    err = float(np.max(np.abs(np.asarray(out, np.float32) - ref)))
    # bf16 final store in the kernel => allow ~1 bf16 ulp at |z| ~ O(1).
    assert err < 3e-2, f"kernel/reference mismatch: max abs err = {err}"
    print("KERNEL_OK")
</pallas_src>

<mosaic_0001>
module attributes {stable_mosaic.version = 11 : i64} {
  func.func @_sage_kernel(%arg0: i32, %arg1: memref<7xi32, #tpu.memory_space<smem>>, %arg2: memref<7xi32, #tpu.memory_space<smem>>, %arg3: memref<7xi32, #tpu.memory_space<smem>>, %arg4: memref<64x128xbf16, #tpu.memory_space<vmem>>, %arg5: memref<1x1x64xi32, #tpu.memory_space<vmem>>, %arg6: memref<16x16xbf16, #tpu.memory_space<vmem>>, %arg7: memref<16x1xf32, #tpu.memory_space<vmem>>, %arg8: memref<16x128xbf16, #tpu.memory_space<vmem>>, %arg9: memref<128x128xbf16, #tpu.memory_space<vmem>>, %arg10: memref<1x128xf32, #tpu.memory_space<vmem>>, %arg11: memref<16x128xbf16, #tpu.memory_space<vmem>>, %arg12: memref<16x128xf32, #tpu.memory_space<vmem>>, %arg13: memref<16x64xi32, #tpu.memory_space<vmem>>) attributes {dimension_semantics = [#tpu.dimension_semantics<arbitrary>], iteration_bounds = array<i64: 7>, scalar_prefetch = 3 : i64, scratch_operands = 2 : i64, tpu.core_type = #tpu.core_type<tc>, window_params = [{transform_indices = @transform_0, window_bounds = array<i64: 64, 128>}, {transform_indices = @transform_1, window_bounds = array<i64: 1, 1, 64>}, {transform_indices = @transform_2, window_bounds = array<i64: 16, 16>}, {transform_indices = @transform_3, window_bounds = array<i64: 16, 1>}, {pipeline_mode = #tpu.pipeline_mode<synchronous>, transform_indices = @transform_4, window_bounds = array<i64: 16, 128>}, {pipeline_mode = #tpu.pipeline_mode<synchronous>, transform_indices = @transform_5, window_bounds = array<i64: 128, 128>}, {pipeline_mode = #tpu.pipeline_mode<synchronous>, transform_indices = @transform_6, window_bounds = array<i64: 1, 128>}, {transform_indices = @transform_7, window_bounds = array<i64: 16, 128>}]} {
    %c0_i32 = arith.constant 0 : i32
    %0 = arith.cmpi eq, %arg0, %c0_i32 : i32
    %1 = arith.extui %0 : i1 to i32
    %c0_i32_0 = arith.constant 0 : i32
    %2 = arith.cmpi ne, %1, %c0_i32_0 : i32
    scf.if %2 {
      %26 = tpu.iota {dimensions = array<i32: 0>} : vector<16x64xi32>
      %c0_14 = arith.constant 0 : index
      %c0_15 = arith.constant 0 : index
      %27 = vector.load %arg13[%c0_14, %c0_15] : memref<16x64xi32, #tpu.memory_space<vmem>>, vector<16x64xi32>
      tpu.vector_store %arg13[%c0_14, %c0_15], %26 {strides = array<i32>} : memref<16x64xi32, #tpu.memory_space<vmem>>, vector<16x64xi32>,
    } else {
    }
    %3 = arith.index_cast %arg0 : i32 to index
    %4 = memref.load %arg2[%3] : memref<7xi32, #tpu.memory_space<smem>>
    %c1_i32 = arith.constant 1 : i32
    %5 = arith.cmpi eq, %4, %c1_i32 : i32
    %6 = arith.extui %5 : i1 to i32
    %c0_i32_1 = arith.constant 0 : i32
    %7 = arith.cmpi ne, %6, %c0_i32_1 : i32
    scf.if %7 {
      %cst_14 = arith.constant 0.000000e+00 : f32
      %26 = vector.broadcast %cst_14 : f32 to vector<16x128xf32>
      %c0_15 = arith.constant 0 : index
      %c0_16 = arith.constant 0 : index
      %27 = vector.load %arg12[%c0_15, %c0_16] : memref<16x128xf32, #tpu.memory_space<vmem>>, vector<16x128xf32>
      tpu.vector_store %arg12[%c0_15, %c0_16], %26 {strides = array<i32>} : memref<16x128xf32, #tpu.memory_space<vmem>>, vector<16x128xf32>,
    } else {
    }
    %c0 = arith.constant 0 : index
    %c0_2 = arith.constant 0 : index
    %8 = vector.load %arg13[%c0, %c0_2] : memref<16x64xi32, #tpu.memory_space<vmem>>, vector<16x64xi32>
    %c0_3 = arith.constant 0 : index
    %c0_4 = arith.constant 0 : index
    %c0_5 = arith.constant 0 : index
    %9 = vector.load %arg5[%c0_3, %c0_4, %c0_5] : memref<1x1x64xi32, #tpu.memory_space<vmem>>, vector<1x1x64xi32>
    %10 = vector.shape_cast %9 : vector<1x1x64xi32> to vector<1x64xi32>
    %11 = vector.broadcast %10 : vector<1x64xi32> to vector<16x64xi32>
    %12 = arith.cmpi eq, %8, %11 : vector<16x64xi32>
    %13 = arith.extui %12 : vector<16x64xi1> to vector<16x64xi32>
    %14 = arith.sitofp %13 : vector<16x64xi32> to vector<16x64xf32>
    %15 = arith.truncf %14 : vector<16x64xf32> to vector<16x64xbf16>
    %c0_6 = arith.constant 0 : index
    %c0_7 = arith.constant 0 : index
    %16 = vector.load %arg12[%c0_6, %c0_7] : memref<16x128xf32, #tpu.memory_space<vmem>>, vector<16x128xf32>
    %c0_8 = arith.constant 0 : index
    %c0_9 = arith.constant 0 : index
    %17 = vector.load %arg4[%c0_8, %c0_9] : memref<64x128xbf16, #tpu.memory_space<vmem>>, vector<64x128xbf16>
    %cst = arith.constant dense<0.000000e+00> : vector<16x128xf32>
    %18 = tpu.matmul %15, %17, %cst {dimension_numbers = #tpu.dot_dimension_numbers<[1], [0], [0], [1], [0, 0, 1, 1], [], []>} : vector<16x64xbf16>, vector<64x128xbf16>, vector<16x128xf32> -> vector<16x128xf32>
    %19 = arith.addf %16, %18 : vector<16x128xf32>
    %c0_10 = arith.constant 0 : index
    %c0_11 = arith.constant 0 : index
    %20 = vector.load %arg12[%c0_10, %c0_11] : memref<16x128xf32, #tpu.memory_space<vmem>>, vector<16x128xf32>
    tpu.vector_store %arg12[%c0_10, %c0_11], %19 {strides = array<i32>} : memref<16x128xf32, #tpu.memory_space<vmem>>, vector<16x128xf32>,
    %21 = arith.index_cast %arg0 : i32 to index
    %22 = memref.load %arg3[%21] : memref<7xi32, #tpu.memory_space<smem>>
    %c1_i32_12 = arith.constant 1 : i32
    %23 = arith.cmpi eq, %22, %c1_i32_12 : i32
    %24 = arith.extui %23 : i1 to i32
    %c0_i32_13 = arith.constant 0 : i32
    %25 = arith.cmpi ne, %24, %c0_i32_13 : i32
    scf.if %25 {
      %c0_14 = arith.constant 0 : index
      %c0_15 = arith.constant 0 : index
      %26 = vector.load %arg12[%c0_14, %c0_15] : memref<16x128xf32, #tpu.memory_space<vmem>>, vector<16x128xf32>
      %c0_16 = arith.constant 0 : index
      %c0_17 = arith.constant 0 : index
      %27 = vector.load %arg7[%c0_16, %c0_17] : memref<16x1xf32, #tpu.memory_space<vmem>>, vector<16x1xf32>
      %28 = vector.broadcast %27 : vector<16x1xf32> to vector<16x128xf32>
      %29 = arith.mulf %26, %28 : vector<16x128xf32>
      %c0_18 = arith.constant 0 : index
      %c0_19 = arith.constant 0 : index
      %30 = vector.load %arg6[%c0_18, %c0_19] : memref<16x16xbf16, #tpu.memory_space<vmem>>, vector<16x16xbf16>
      %c0_20 = arith.constant 0 : index
      %c0_21 = arith.constant 0 : index
      %31 = vector.load %arg8[%c0_20, %c0_21] : memref<16x128xbf16, #tpu.memory_space<vmem>>, vector<16x128xbf16>
      %cst_22 = arith.constant dense<0.000000e+00> : vector<16x128xf32>
      %32 = tpu.matmul %30, %31, %cst_22 {dimension_numbers = #tpu.dot_dimension_numbers<[1], [0], [0], [1], [0, 0, 1, 1], [], []>} : vector<16x16xbf16>, vector<16x128xbf16>, vector<16x128xf32> -> vector<16x128xf32>
      %33 = arith.truncf %29 : vector<16x128xf32> to vector<16x128xbf16>
      %c0_23 = arith.constant 0 : index
      %c0_24 = arith.constant 0 : index
      %34 = vector.load %arg9[%c0_23, %c0_24] : memref<128x128xbf16, #tpu.memory_space<vmem>>, vector<128x128xbf16>
      %cst_25 = arith.constant dense<0.000000e+00> : vector<16x128xf32>
      %35 = tpu.matmul %33, %34, %cst_25 {dimension_numbers = #tpu.dot_dimension_numbers<[1], [0], [0], [1], [0, 0, 1, 1], [], []>} : vector<16x128xbf16>, vector<128x128xbf16>, vector<16x128xf32> -> vector<16x128xf32>
      %36 = arith.addf %32, %35 : vector<16x128xf32>
      %c0_26 = arith.constant 0 : index
      %c0_27 = arith.constant 0 : index
      %37 = vector.load %arg10[%c0_26, %c0_27] : memref<1x128xf32, #tpu.memory_space<vmem>>, vector<1x128xf32>
      %38 = vector.broadcast %37 : vector<1x128xf32> to vector<16x128xf32>
      %39 = arith.addf %36, %38 : vector<16x128xf32>
      %cst_28 = arith.constant 0.000000e+00 : f32
      %40 = vector.broadcast %cst_28 : f32 to vector<16x128xf32>
      %41 = arith.maximumf %39, %40 : vector<16x128xf32>
      %42 = arith.truncf %41 : vector<16x128xf32> to vector<16x128xbf16>
      %c0_29 = arith.constant 0 : index
      %c0_30 = arith.constant 0 : index
      %43 = vector.load %arg11[%c0_29, %c0_30] : memref<16x128xbf16, #tpu.memory_space<vmem>>, vector<16x128xbf16>
      tpu.vector_store %arg11[%c0_29, %c0_30], %42 {strides = array<i32>} : memref<16x128xbf16, #tpu.memory_space<vmem>>, vector<16x128xbf16>,
    } else {
    }
    return
  }
  func.func @transform_0(%arg0: i32, %arg1: memref<7xi32, #tpu.memory_space<smem>>, %arg2: memref<7xi32, #tpu.memory_space<smem>>, %arg3: memref<7xi32, #tpu.memory_space<smem>>) -> (i32, i32) {
    %c0_i32 = arith.constant 0 : i32
    %c0_i32_0 = arith.constant 0 : i32
    return %arg0, %c0_i32 : i32, i32
  }
  func.func @transform_1(%arg0: i32, %arg1: memref<7xi32, #tpu.memory_space<smem>>, %arg2: memref<7xi32, #tpu.memory_space<smem>>, %arg3: memref<7xi32, #tpu.memory_space<smem>>) -> (i32, i32, i32) {
    %c0_i32 = arith.constant 0 : i32
    %c0_i32_0 = arith.constant 0 : i32
    %c0_i32_1 = arith.constant 0 : i32
    return %arg0, %c0_i32, %c0_i32_0 : i32, i32, i32
  }
  func.func @transform_2(%arg0: i32, %arg1: memref<7xi32, #tpu.memory_space<smem>>, %arg2: memref<7xi32, #tpu.memory_space<smem>>, %arg3: memref<7xi32, #tpu.memory_space<smem>>) -> (i32, i32) {
    %0 = arith.index_cast %arg0 : i32 to index
    %1 = memref.load %arg1[%0] : memref<7xi32, #tpu.memory_space<smem>>
    %c0_i32 = arith.constant 0 : i32
    %c0_i32_0 = arith.constant 0 : i32
    return %1, %c0_i32 : i32, i32
  }
  func.func @transform_3(%arg0: i32, %arg1: memref<7xi32, #tpu.memory_space<smem>>, %arg2: memref<7xi32, #tpu.memory_space<smem>>, %arg3: memref<7xi32, #tpu.memory_space<smem>>) -> (i32, i32) {
    %0 = arith.index_cast %arg0 : i32 to index
    %1 = memref.load %arg1[%0] : memref<7xi32, #tpu.memory_space<smem>>
    %c0_i32 = arith.constant 0 : i32
    %c0_i32_0 = arith.constant 0 : i32
    return %1, %c0_i32 : i32, i32
  }
  func.func @transform_4(%arg0: i32, %arg1: memref<7xi32, #tpu.memory_space<smem>>, %arg2: memref<7xi32, #tpu.memory_space<smem>>, %arg3: memref<7xi32, #tpu.memory_space<smem>>) -> (i32, i32) {
    %c0_i32 = arith.constant 0 : i32
    %c0_i32_0 = arith.constant 0 : i32
    %c0_i32_1 = arith.constant 0 : i32
    return %c0_i32, %c0_i32_0 : i32, i32
  }
  func.func @transform_5(%arg0: i32, %arg1: memref<7xi32, #tpu.memory_space<smem>>, %arg2: memref<7xi32, #tpu.memory_space<smem>>, %arg3: memref<7xi32, #tpu.memory_space<smem>>) -> (i32, i32) {
    %c0_i32 = arith.constant 0 : i32
    %c0_i32_0 = arith.constant 0 : i32
    %c0_i32_1 = arith.constant 0 : i32
    return %c0_i32, %c0_i32_0 : i32, i32
  }
  func.func @transform_6(%arg0: i32, %arg1: memref<7xi32, #tpu.memory_space<smem>>, %arg2: memref<7xi32, #tpu.memory_space<smem>>, %arg3: memref<7xi32, #tpu.memory_space<smem>>) -> (i32, i32) {
    %c0_i32 = arith.constant 0 : i32
    %c0_i32_0 = arith.constant 0 : i32
    %c0_i32_1 = arith.constant 0 : i32
    return %c0_i32, %c0_i32_0 : i32, i32
  }
  func.func @transform_7(%arg0: i32, %arg1: memref<7xi32, #tpu.memory_space<smem>>, %arg2: memref<7xi32, #tpu.memory_space<smem>>, %arg3: memref<7xi32, #tpu.memory_space<smem>>) -> (i32, i32) {
    %0 = arith.index_cast %arg0 : i32 to index
    %1 = memref.load %arg1[%0] : memref<7xi32, #tpu.memory_space<smem>>
    %c0_i32 = arith.constant 0 : i32
    %c0_i32_0 = arith.constant 0 : i32
    return %1, %c0_i32 : i32, i32
  }
}

</mosaic_0001>

<llo_original>
// kernel: tpu_custom_call.1
$region0: #{tpu_custom_call.1}
  #allocation0 [shape = 'u32[]', space=smem, size = 0x4, offset = 0x4, fixed_abs, tag = 'smem constant byte address 0x4 - core index']
  #allocation1 [shape = 'u32[144,128]{1,0:T(1,128)}', space=vmem, size = 0x12000, scoped, tag = 'internal scratch']
  #allocation2 [shape = 'f32[16,128]{1,0:T(8,128)}', space=vmem, size = 0x2000, scoped, tag = 'scratch operand']
  #allocation3 [shape = 's32[16,64]{1,0:T(8,128)}', space=vmem, size = 0x2000, scoped, tag = 'scratch operand']
  #allocation4 [shape = 's32[1]{0}', space=sflag, size = 0x4, scoped, tag = 'scoped memory for tpu_custom_call.1']
  #allocation5 [shape = 'u8[512]{0}', space=smem, size = 0x200, scoped, tag = 'prefetched SMEM operand 0']
  #allocation6 [shape = 'u8[512]{0}', space=smem, size = 0x200, scoped, tag = 'prefetched SMEM operand 1']
  #allocation7 [shape = 'u8[512]{0}', space=smem, size = 0x200, scoped, tag = 'prefetched SMEM operand 2']
  %s0 = inlined_call_operand.vmem [shape: s32[7], index: 0, kind: input, shape index: {}]
  %s1 = inlined_call_operand.vmem [shape: s32[7], index: 1, kind: input, shape index: {}]
  %s2 = inlined_call_operand.vmem [shape: s32[7], index: 2, kind: input, shape index: {}]
  %s3 = inlined_call_operand.hbm [shape: bf16[448,128], index: 3, kind: input, shape index: {}]
  %s4 = inlined_call_operand.vmem [shape: s32[7,1,64], index: 4, kind: input, shape index: {}]
  %s5 = inlined_call_operand.vmem [shape: bf16[64,16], index: 5, kind: input, shape index: {}]
  %s6 = inlined_call_operand.vmem [shape: f32[64,1], index: 6, kind: input, shape index: {}]
  %s7 = inlined_call_operand.vmem [shape: bf16[16,128], index: 7, kind: input, shape index: {}]
  %s8 = inlined_call_operand.vmem [shape: bf16[128,128], index: 8, kind: input, shape index: {}]
  %s9 = inlined_call_operand.vmem [shape: f32[1,128], index: 9, kind: input, shape index: {}]
  %s10 = inlined_call_operand.hbm [shape: bf16[64,128], index: 10, kind: output, shape index: {}]
  %s11 = sld [smem:[#allocation0]]
  $region77: #{tpu_custom_call.1} parent=0
    _
  %s13 = ssub.s32 1, %s11
  %s14 = scalar_select 0, %s13, %s11
  %s15 = sshll.u32 %s0, 4
  %s16 = int_to_ptr.vmem [resolvable:$true] %s15
  %18 = dma.vmem_to_smem %s16, 16, [#allocation5], [#allocation4]
  %s19 = sshll.u32 %s1, 4
  %s20 = int_to_ptr.vmem [resolvable:$true] %s19
  %22 = dma.vmem_to_smem %s20, 16, [#allocation6], [#allocation4]
  %s23 = sshll.u32 %s2, 4
  %s24 = int_to_ptr.vmem [resolvable:$true] %s23
  %26 = dma.vmem_to_smem %s24, 16, [#allocation7], [#allocation4]
  %27 = dma.done [#allocation4], 48
  %28 = sfence
  $region1: #{tpu_custom_call.1} parent=0
    #allocation8 [shape = 'u8[32768]{0}', space=vmem, size = 0x8000, scoped, tag = 'input window, operand 3']
    #allocation9 [shape = 's32[2]{0}', space=sflag, size = 0x8, scoped, tag = 'scoped memory for tpu_custom_call.1']
    #allocation10 [shape = 's32[2]{0}', space=sflag, size = 0x8, scoped, tag = 'scoped memory for tpu_custom_call.1']
    #allocation11 [shape = 'u8[8192]{0}', space=vmem, size = 0x2000, scoped, tag = 'output window, operand 0']
    %29 = vsyncpa [#allocation9], 0
    %s30 = scalar_lea.sflag [#allocation9], 1
    %31 = vsyncpa %s30, 0
    %32 = vsyncpa [#allocation10], 0
    %s33 = scalar_lea.sflag [#allocation10], 1
    %34 = vsyncpa %s33, 0
    loop: start=0, step=1, limit=9
    $region2: #{tpu_custom_call.1} parent=1 // loop_pre_header
      _
    $region3: #{tpu_custom_call.1} parent=1 // loop_header
      %s36 = sphi 0, %s40
      %p37 = scmp.ge.s32.totalorder %s36, 9
      %s46 = sphi 0, %s48
      %s49 = sphi 0, %s46
      %s50 = sphi 0, %s49
      %s66 = sphi 0, %s50
      %s72 = sphi 0, %s74
      %s75 = sphi 0, %s72
      %s76 = sphi 0, %s75
      %s92 = sphi 0, %s76
      %s100 = sphi 0, %s102
      %s103 = sphi 0, %s100
      %s104 = sphi 0, %s103
      %s120 = sphi 0, %s104
      %s128 = sphi 0, %s130
      %s131 = sphi 0, %s128
      %s132 = sphi 0, %s131
      %s148 = sphi 0, %s132
      %s152 = sphi 0, %s152
      %s154 = sphi 0, %s152
      %s155 = sphi 0, %s154
      %s169 = sphi 0, %s155
      %s173 = sphi 0, %s173
      %s175 = sphi 0, %s173
      %s176 = sphi 0, %s175
      %s190 = sphi 0, %s176
      %s194 = sphi 0, %s194
      %s196 = sphi 0, %s194
      %s197 = sphi 0, %s196
      %s211 = sphi 0, %s197
      %s219 = sphi 0, %s221
      %s222 = sphi 0, %s219
      %s223 = sphi 0, %s222
      %s239 = sphi 0, %s223
    $region4: #{tpu_custom_call.1} parent=1 // loop_header_branch
      %39 = sbr.rel (%p37) target = $region8
    $region5: #{tpu_custom_call.1} parent=1 // loop_body
      %s41 = ssub.s32 %s36, 1
      %s42 = ssub.s32 %s36, 2
      %s43 = sadd.s32 %s36, 1
      %s44 = ssub.s32 %s36, %s43
      %p45 = scmp.eq.s32.totalorder %s44, 0
      %s47 = sadd.s32 %s46, 1
      %s48 = scalar_select %p45, %s46, %s47
      %p51 = pneg %p45
      %p52 = scmp.eq.s32.totalorder %s36, 6
      %p53 = por %p51, %p52
      %p54 = scmp.ne.s32.totalorder %s46, %s49
      %p55 = scmp.eq.s32.totalorder %s36, 0
      %p56 = por %p54, %p55
      %p57 = scmp.ne.s32.totalorder %s46, %s49
      %p58 = scmp.eq.s32.totalorder %s41, 6
      %p59 = por %p57, %p58
      %p60 = scmp.ne.s32.totalorder %s49, %s50
      %p61 = scmp.eq.s32.totalorder %s41, 0
      %p62 = por %p60, %p61
      %p63 = scmp.ne.s32.totalorder %s49, %s50
      %p64 = scmp.eq.s32.totalorder %s42, 6
      %p65 = por %p63, %p64
      %p67 = scmp.ne.s32.totalorder %s50, %s66
      %p68 = scmp.eq.s32.totalorder %s42, 0
      %p69 = por %p67, %p68
      %s70 = ssub.s32 %s36, %s43
      %p71 = scmp.eq.s32.totalorder %s70, 0
      %s73 = sadd.s32 %s72, 1
      %s74 = scalar_select %p71, %s72, %s73
      %p77 = pneg %p71
      %p78 = scmp.eq.s32.totalorder %s36, 6
      %p79 = por %p77, %p78
      %p80 = scmp.ne.s32.totalorder %s72, %s75
      %p81 = scmp.eq.s32.totalorder %s36, 0
      %p82 = por %p80, %p81
      %p83 = scmp.ne.s32.totalorder %s72, %s75
      %p84 = scmp.eq.s32.totalorder %s41, 6
      %p85 = por %p83, %p84
      %p86 = scmp.ne.s32.totalorder %s75, %s76
      %p87 = scmp.eq.s32.totalorder %s41, 0
      %p88 = por %p86, %p87
      %p89 = scmp.ne.s32.totalorder %s75, %s76
      %p90 = scmp.eq.s32.totalorder %s42, 6
      %p91 = por %p89, %p90
      %p93 = scmp.ne.s32.totalorder %s76, %s92
      %p94 = scmp.eq.s32.totalorder %s42, 0
      %p95 = por %p93, %p94
      %s96 = sld [smem:[#allocation5 + %s36]]
      %s97 = sld [smem:[#allocation5 + %s43]]
      %s98 = ssub.s32 %s96, %s97
      %p99 = scmp.eq.s32.totalorder %s98, 0
      %s101 = sadd.s32 %s100, 1
      %s102 = scalar_select %p99, %s100, %s101
      %p105 = pneg %p99
      %p106 = scmp.eq.s32.totalorder %s36, 6
      %p107 = por %p105, %p106
      %p108 = scmp.ne.s32.totalorder %s100, %s103
      %p109 = scmp.eq.s32.totalorder %s36, 0
      %p110 = por %p108, %p109
      %p111 = scmp.ne.s32.totalorder %s100, %s103
      %p112 = scmp.eq.s32.totalorder %s41, 6
      %p113 = por %p111, %p112
      %p114 = scmp.ne.s32.totalorder %s103, %s104
      %p115 = scmp.eq.s32.totalorder %s41, 0
      %p116 = por %p114, %p115
      %p117 = scmp.ne.s32.totalorder %s103, %s104
      %p118 = scmp.eq.s32.totalorder %s42, 6
      %p119 = por %p117, %p118
      %p121 = scmp.ne.s32.totalorder %s104, %s120
      %p122 = scmp.eq.s32.totalorder %s42, 0
      %p123 = por %p121, %p122
      %s124 = sld [smem:[#allocation5 + %s36]]
      %s125 = sld [smem:[#allocation5 + %s43]]
      %s126 = ssub.s32 %s124, %s125
      %p127 = scmp.eq.s32.totalorder %s126, 0
      %s129 = sadd.s32 %s128, 1
      %s130 = scalar_select %p127, %s128, %s129
      %p133 = pneg %p127
      %p134 = scmp.eq.s32.totalorder %s36, 6
      %p135 = por %p133, %p134
      %p136 = scmp.ne.s32.totalorder %s128, %s131
      %p137 = scmp.eq.s32.totalorder %s36, 0
      %p138 = por %p136, %p137
      %p139 = scmp.ne.s32.totalorder %s128, %s131
      %p140 = scmp.eq.s32.totalorder %s41, 6
      %p141 = por %p139, %p140
      %p142 = scmp.ne.s32.totalorder %s131, %s132
      %p143 = scmp.eq.s32.totalorder %s41, 0
      %p144 = por %p142, %p143
      %p145 = scmp.ne.s32.totalorder %s131, %s132
      %p146 = scmp.eq.s32.totalorder %s42, 6
      %p147 = por %p145, %p146
      %p149 = scmp.ne.s32.totalorder %s132, %s148
      %p150 = scmp.eq.s32.totalorder %s42, 0
      %p151 = por %p149, %p150
      %s153 = sadd.s32 %s152, 1
      %p156 = scmp.eq.s32.totalorder %s36, 6
      %p157 = scmp.ne.s32.totalorder %s152, %s154
      %p158 = scmp.eq.s32.totalorder %s36, 0
      %p159 = por %p157, %p158
      %p160 = scmp.ne.s32.totalorder %s152, %s154
      %p161 = scmp.eq.s32.totalorder %s41, 6
      %p162 = por %p160, %p161
      %p163 = scmp.ne.s32.totalorder %s154, %s155
      %p164 = scmp.eq.s32.totalorder %s41, 0
      %p165 = por %p163, %p164
      %p166 = scmp.ne.s32.totalorder %s154, %s155
      %p167 = scmp.eq.s32.totalorder %s42, 6
      %p168 = por %p166, %p167
      %p170 = scmp.ne.s32.totalorder %s155, %s169
      %p171 = scmp.eq.s32.totalorder %s42, 0
      %p172 = por %p170, %p171
      %s174 = sadd.s32 %s173, 1
      %p177 = scmp.eq.s32.totalorder %s36, 6
      %p178 = scmp.ne.s32.totalorder %s173, %s175
      %p179 = scmp.eq.s32.totalorder %s36, 0
      %p180 = por %p178, %p179
      %p181 = scmp.ne.s32.totalorder %s173, %s175
      %p182 = scmp.eq.s32.totalorder %s41, 6
      %p183 = por %p181, %p182
      %p184 = scmp.ne.s32.totalorder %s175, %s176
      %p185 = scmp.eq.s32.totalorder %s41, 0
      %p186 = por %p184, %p185
      %p187 = scmp.ne.s32.totalorder %s175, %s176
      %p188 = scmp.eq.s32.totalorder %s42, 6
      %p189 = por %p187, %p188
      %p191 = scmp.ne.s32.totalorder %s176, %s190
      %p192 = scmp.eq.s32.totalorder %s42, 0
      %p193 = por %p191, %p192
      %s195 = sadd.s32 %s194, 1
      %p198 = scmp.eq.s32.totalorder %s36, 6
      %p199 = scmp.ne.s32.totalorder %s194, %s196
      %p200 = scmp.eq.s32.totalorder %s36, 0
      %p201 = por %p199, %p200
      %p202 = scmp.ne.s32.totalorder %s194, %s196
      %p203 = scmp.eq.s32.totalorder %s41, 6
      %p204 = por %p202, %p203
      %p205 = scmp.ne.s32.totalorder %s196, %s197
      %p206 = scmp.eq.s32.totalorder %s41, 0
      %p207 = por %p205, %p206
      %p208 = scmp.ne.s32.totalorder %s196, %s197
      %p209 = scmp.eq.s32.totalorder %s42, 6
      %p210 = por %p208, %p209
      %p212 = scmp.ne.s32.totalorder %s197, %s211
      %p213 = scmp.eq.s32.totalorder %s42, 0
      %p214 = por %p212, %p213
      %s215 = sld [smem:[#allocation5 + %s36]]
      %s216 = sld [smem:[#allocation5 + %s43]]
      %s217 = ssub.s32 %s215, %s216
      %p218 = scmp.eq.s32.totalorder %s217, 0
      %s220 = sadd.s32 %s219, 1
      %s221 = scalar_select %p218, %s219, %s220
      %p224 = pneg %p218
      %p225 = scmp.eq.s32.totalorder %s36, 6
      %p226 = por %p224, %p225
      %p227 = scmp.ne.s32.totalorder %s219, %s222
      %p228 = scmp.eq.s32.totalorder %s36, 0
      %p229 = por %p227, %p228
      %p230 = scmp.ne.s32.totalorder %s219, %s222
      %p231 = scmp.eq.s32.totalorder %s41, 6
      %p232 = por %p230, %p231
      %p233 = scmp.ne.s32.totalorder %s222, %s223
      %p234 = scmp.eq.s32.totalorder %s41, 0
      %p235 = por %p233, %p234
      %p236 = scmp.ne.s32.totalorder %s222, %s223
      %p237 = scmp.eq.s32.totalorder %s42, 6
      %p238 = por %p236, %p237
      %p240 = scmp.ne.s32.totalorder %s223, %s239
      %p241 = scmp.eq.s32.totalorder %s42, 0
      %p242 = por %p240, %p241
      %p243 = scmp.le.s32.totalorder 1, %s36
      %p244 = scmp.lt.s32.totalorder %s36, 8
      %p245 = pnand %p243, %p244
      %p246 = pneg %p245
      // Predicated region
      $region9: #{tpu_custom_call.1} parent=5 // pred_check
        _
      $region10: #{tpu_custom_call.1} parent=5 // pred_check_branch
        %248 = sbr.rel (%p245) target = $region12
      $region11: #{tpu_custom_call.1} parent=5 // pred_region
        %s249 = ssub.s32 %s36, 1
        // Predicated region
        $region13: #{tpu_custom_call.1} parent=11 // pred_check
          %p250 = pneg %p165
        $region14: #{tpu_custom_call.1} parent=11 // pred_check_branch
          %252 = sbr.rel (%p250) target = $region16
        $region15: #{tpu_custom_call.1} parent=11 // pred_region
          _
        $region16: #{tpu_custom_call.1} parent=11 // pred_fallthru
          _
        // Predicated region
        $region17: #{tpu_custom_call.1} parent=11 // pred_check
          %p253 = pneg %p186
        $region18: #{tpu_custom_call.1} parent=11 // pred_check_branch
          %255 = sbr.rel (%p253) target = $region20
        $region19: #{tpu_custom_call.1} parent=11 // pred_region
          _
        $region20: #{tpu_custom_call.1} parent=11 // pred_fallthru
          _
        // Predicated region
        $region21: #{tpu_custom_call.1} parent=11 // pred_check
          %p256 = pneg %p207
        $region22: #{tpu_custom_call.1} parent=11 // pred_check_branch
          %258 = sbr.rel (%p256) target = $region24
        $region23: #{tpu_custom_call.1} parent=11 // pred_region
          _
        $region24: #{tpu_custom_call.1} parent=11 // pred_fallthru
          _
      $region12: #{tpu_custom_call.1} parent=5 // pred_fallthru
        _
      %p259 = scmp.lt.s32.totalorder %s36, 7
      // Predicated region
      $region25: #{tpu_custom_call.1} parent=5 // pred_check
        %p260 = pneg %p259
      $region26: #{tpu_custom_call.1} parent=5 // pred_check_branch
        %262 = sbr.rel (%p260) target = $region28
      $region27: #{tpu_custom_call.1} parent=5 // pred_region
        // Predicated region
        $region29: #{tpu_custom_call.1} parent=27 // pred_check
          %p263 = pneg %p56
        $region30: #{tpu_custom_call.1} parent=27 // pred_check_branch
          %265 = sbr.rel (%p263) target = $region32
        $region31: #{tpu_custom_call.1} parent=27 // pred_region
          %s266 = sand.u32 %s46, 1
          %s267 = scalar_lea.sflag [#allocation9], %s266
          %s268 = sand.u32 %s46, 1
          %s269 = smul.addr %s268, 32
          %s270 = scalar_lea.vmem [#allocation8], %s269
          %s271 = smul.u32 8, %s36
          %s273 = ssub.s32 512, 512
          %274 = vsyncadd %s267, %s273
          %s275 = smul.addr %s271, 64
          %s276 = scalar_lea.hbm %s3, %s275
          %s277 = sshll.u32 %s270, 4
          %s278 = int_to_ptr.vmem [resolvable:$true] %s277
          %283 = dma.hbm_to_vmem [thread:$0]  %s276, 512, %s278, %s267, 64, 64, 4
        $region32: #{tpu_custom_call.1} parent=27 // pred_fallthru
          _
        // Predicated region
        $region33: #{tpu_custom_call.1} parent=27 // pred_check
          %p284 = pneg %p82
        $region34: #{tpu_custom_call.1} parent=27 // pred_check_branch
          %286 = sbr.rel (%p284) target = $region36
        $region35: #{tpu_custom_call.1} parent=27 // pred_region
          %p287 = scmp.lt.s32.totalorder %s36, 6
          %s288 = scalar_select %p287, %s36, 6
          %s289 = scalar_lea.vmem %s4, %s288
        $region36: #{tpu_custom_call.1} parent=27 // pred_fallthru
          _
        // Predicated region
        $region37: #{tpu_custom_call.1} parent=27 // pred_check
          %p290 = pneg %p110
        $region38: #{tpu_custom_call.1} parent=27 // pred_check_branch
          %292 = sbr.rel (%p290) target = $region40
        $region39: #{tpu_custom_call.1} parent=27 // pred_region
          %s293 = sld [smem:[#allocation5 + %s36]]
          %s294 = smul.u32 2, %s293
          %p295 = scmp.lt.s32.totalorder %s294, 7
          %s296 = scalar_select %p295, %s294, 7
          %s297 = smul.addr %s296, 4
          %s298 = scalar_lea.vmem %s5, %s297
          %s299 = sld [smem:[#allocation5 + %s36]]
          %s300 = smul.u32 2, %s299
        $region40: #{tpu_custom_call.1} parent=27 // pred_fallthru
          _
        // Predicated region
        $region41: #{tpu_custom_call.1} parent=27 // pred_check
          %p301 = pneg %p138
        $region42: #{tpu_custom_call.1} parent=27 // pred_check_branch
          %303 = sbr.rel (%p301) target = $region44
        $region43: #{tpu_custom_call.1} parent=27 // pred_region
          %s304 = sld [smem:[#allocation5 + %s36]]
          %s305 = smul.u32 2, %s304
          %p306 = scmp.lt.s32.totalorder %s305, 7
          %s307 = scalar_select %p306, %s305, 7
          %s308 = smul.addr %s307, 8
          %s309 = scalar_lea.vmem %s6, %s308
          %s310 = sld [smem:[#allocation5 + %s36]]
          %s311 = smul.u32 2, %s310
        $region44: #{tpu_custom_call.1} parent=27 // pred_fallthru
          _
      $region28: #{tpu_custom_call.1} parent=5 // pred_fallthru
        _
      %p312 = scmp.le.s32.totalorder 1, %s36
      %p313 = scmp.lt.s32.totalorder %s36, 8
      %p314 = pnand %p312, %p313
      %p315 = pneg %p314
      // Predicated region
      $region45: #{tpu_custom_call.1} parent=5 // pred_check
        _
      $region46: #{tpu_custom_call.1} parent=5 // pred_check_branch
        %317 = sbr.rel (%p314) target = $region48
      $region47: #{tpu_custom_call.1} parent=5 // pred_region
        %s318 = ssub.s32 %s36, 1
        %s319 = sand.u32 %s49, 1
        %s320 = scalar_lea.sflag [#allocation9], %s319
        %s321 = sand.u32 %s49, 1
        %s322 = smul.addr %s321, 32
        %s323 = scalar_lea.vmem [#allocation8], %s322
        // Predicated region
        $region49: #{tpu_custom_call.1} parent=47 // pred_check
          %p324 = pneg %p62
        $region50: #{tpu_custom_call.1} parent=47 // pred_check_branch
          %326 = sbr.rel (%p324) target = $region52
        $region51: #{tpu_custom_call.1} parent=47 // pred_region
          %327 = dma.done %s320, 512
        $region52: #{tpu_custom_call.1} parent=47 // pred_fallthru
          _
        %s328 = sand.u32 %s49, 1
        %s329 = scalar_lea.sflag [#allocation9], %s328
        %s330 = sand.u32 %s49, 1
        %s331 = smul.addr %s330, 32
        %s332 = scalar_lea.vmem [#allocation8], %s331
        %p333 = pneg %p62
        %p334 = pneg %p59
        %p335 = scmp.lt.s32.totalorder %s41, 6
        %s336 = scalar_select %p335, %s41, 6
        %s337 = scalar_lea.vmem %s4, %s336
        %p338 = pneg %p88
        %p339 = pneg %p85
        %s340 = sld [smem:[#allocation5 + %s41]]
        %s341 = smul.u32 2, %s340
        %p342 = scmp.lt.s32.totalorder %s341, 7
        %s343 = scalar_select %p342, %s341, 7
        %s344 = smul.addr %s343, 4
        %s345 = scalar_lea.vmem %s5, %s344
        %p346 = pneg %p116
        %p347 = pneg %p113
        %s348 = sld [smem:[#allocation5 + %s41]]
        %s349 = smul.u32 2, %s348
        %p350 = scmp.lt.s32.totalorder %s349, 7
        %s351 = scalar_select %p350, %s349, 7
        %s352 = smul.addr %s351, 8
        %s353 = scalar_lea.vmem %s6, %s352
        %p354 = pneg %p144
        %p355 = pneg %p141
        %p356 = pneg %p165
        %p357 = pneg %p162
        %p358 = pneg %p186
        %p359 = pneg %p183
        %p360 = pneg %p207
        %p361 = pneg %p204
        %p362 = pneg %p235
        %p363 = pneg %p232
        %s364 = sand.u32 %s222, 1
        %s365 = scalar_lea.sflag [#allocation10], %s364
        %s366 = sand.u32 %s222, 1
        %s367 = smul.addr %s366, 8
        %s368 = scalar_lea.vmem [#allocation11], %s367
        %s369 = smul.u32 8, %s41
        %p370 = scmp.lt.s32.totalorder %s41, 6
        %s371 = scalar_select %p370, %s41, 6
        %s372 = scalar_lea.vmem %s4, %s371
        %s373 = sld [smem:[#allocation5 + %s41]]
        %s374 = smul.u32 2, %s373
        %p375 = scmp.lt.s32.totalorder %s374, 7
        %s376 = scalar_select %p375, %s374, 7
        %s377 = smul.addr %s376, 4
        %s378 = scalar_lea.vmem %s5, %s377
        %s379 = sld [smem:[#allocation5 + %s41]]
        %s380 = smul.u32 2, %s379
        %s381 = sld [smem:[#allocation5 + %s41]]
        %s382 = smul.u32 2, %s381
        %p383 = scmp.lt.s32.totalorder %s382, 7
        %s384 = scalar_select %p383, %s382, 7
        %s385 = smul.addr %s384, 8
        %s386 = scalar_lea.vmem %s6, %s385
        %s387 = sld [smem:[#allocation5 + %s41]]
        %s388 = smul.u32 2, %s387
        %s389 = sld [smem:[#allocation5 + %s41]]
        %s390 = smul.u32 2, %s389
        %p392 = scmp.eq.s32.totalorder %s41, 0
        // Predicated region
        $region53: #{tpu_custom_call.1} parent=47 // pred_check
          %p393 = pneg %p392
        $region54: #{tpu_custom_call.1} parent=47 // pred_check_branch
          %395 = sbr.rel (%p393) target = $region56
        $region55: #{tpu_custom_call.1} parent=47 // pred_region
          %v396 = vlaneseq
          %v397 = vshrl.u32 %v396, 7
          %v398 = vadd.s32 %v397, 8
          %vm399 = vcmask 523264
          %400 = vst.msk [vmem:[#allocation3] sm:$0xff] %vm399, %v397
          %401 = vst.msk [vmem:[#allocation3 + $0x8] sm:$0xff] %vm399, %v398
        $region56: #{tpu_custom_call.1} parent=47 // pred_fallthru
          _
        %s402 = sld [smem:[#allocation6 + %s41]]
        %p403 = scmp.eq.s32.totalorder %s402, 1
        // Predicated region
        $region57: #{tpu_custom_call.1} parent=47 // pred_check
          %p404 = pneg %p403
        $region58: #{tpu_custom_call.1} parent=47 // pred_check_branch
          %406 = sbr.rel (%p404) target = $region60
        $region59: #{tpu_custom_call.1} parent=47 // pred_region
          %407 = vst [vmem:[#allocation2] sm:$0xff] 0.0
          %408 = vst [vmem:[#allocation2 + $0x8] sm:$0xff] 0.0
        $region60: #{tpu_custom_call.1} parent=47 // pred_fallthru
          _
        %v409 = vld [vmem:[#allocation3] sm:$0xff]
        %v410 = vld [vmem:[#allocation3 + $0x8] sm:$0xff]
        %v411 = vld [vmem:[%s372] sm:$0x1]
        %v412 = vlaneseq
        %v413 = vshrl.u32 %v412, 7
        %v414 = vsub.s32 0, %v413
        %v415 = vrot.slane %v411, %v414
        %vm416 = vcmp.eq.s32.totalorder %v409, %v415
        %vm417 = vcmp.eq.s32.totalorder %v410, %v415
        %v418 = vsel %vm416, 1, 0
        %v419 = vsel %vm417, 1, 0
        %v420 = vcvt.s32.f32 %v418
        %v421 = vcvt.s32.f32 %v419
        %v422 = vpack.c.bf16 %v421, %v420
        %v423 = vld [vmem:[#allocation2] sm:$0xff]
        %v424 = vld [vmem:[#allocation2 + $0x8] sm:$0xff]
        %v425 = vld [vmem:[%s323] sm:$0xf]
        %v426 = vld [vmem:[%s323 + $0x4] sm:$0xf]
        %v427 = vld [vmem:[%s323 + $0x8] sm:$0xf]
        %v428 = vld [vmem:[%s323 + $0xc] sm:$0xf]
        %v429 = vld [vmem:[%s323 + $0x10] sm:$0xf]
        %v430 = vld [vmem:[%s323 + $0x14] sm:$0xf]
        %v431 = vld [vmem:[%s323 + $0x18] sm:$0xf]
        %v432 = vld [vmem:[%s323 + $0x1c] sm:$0xf]
        %v441 = vunpack.c.l.b16 %v425
        %v442 = vunpack.c.l.b16 %v426
        %v443 = vunpack.c.l.b16 %v427
        %v444 = vunpack.c.l.b16 %v428
        %v445 = vunpack.c.l.b16 %v429
        %v446 = vunpack.c.l.b16 %v430
        %v447 = vunpack.c.l.b16 %v431
        %v448 = vunpack.c.l.b16 %v432
        %v449 = vpack.c.b16 %v442, %v441
        %v450 = vpack.c.b16 %v444, %v443
        %v451 = vpack.c.b16 %v446, %v445
        %v452 = vpack.c.b16 %v448, %v447
        %vm457 = vcmask 523264
        %v459 = vsel %vm457, %v422, 0
        %461 = vmatprep.subr.bf16.mxu0 0
        %462 = vmatpush1.bf16.msra.mxu0 %v449
        %463 = vmatprep.subr.bf16.mxu0 0
        %464 = vmatpush1.bf16.msra.mxu0 %v450
        %465 = vmatprep.subr.bf16.mxu0 0
        %466 = vmatpush1.bf16.msra.mxu0 %v451
        %467 = vmatprep.subr.bf16.mxu0 0
        %468 = vmatpush1.bf16.msra.mxu0 %v452
        %469 = vmatprep.subr.bf16.mxu0 0
        %470 = vmatpush1.bf16.msra.mxu0 0
        %471 = vmatprep.subr.bf16.mxu0 0
        %472 = vmatpush1.bf16.msra.mxu0 0
        %473 = vmatprep.subr.bf16.mxu0 0
        %474 = vmatpush1.bf16.msra.mxu0 0
        %475 = vmatprep.subr.bf16.mxu0 0
        %476 = vmatpush1.bf16.msra.mxu0 0
        %477 = vmatprep.subr.bf16.mxu0 0
        %478 = vmatpush1.bf16.msra.mxu0 0
        %479 = vmatprep.subr.bf16.mxu0 0
        %480 = vmatpush1.bf16.msra.mxu0 0
        %481 = vmatprep.subr.bf16.mxu0 0
        %482 = vmatpush1.bf16.msra.mxu0 0
        %483 = vmatprep.subr.bf16.mxu0 0
        %484 = vmatpush1.bf16.msra.mxu0 0
        %485 = vmatprep.subr.bf16.mxu0 0
        %486 = vmatpush1.bf16.msra.mxu0 0
        %487 = vmatprep.subr.bf16.mxu0 0
        %488 = vmatpush1.bf16.msra.mxu0 0
        %489 = vmatprep.subr.bf16.mxu0 0
        %490 = vmatpush1.bf16.msra.mxu0 0
        %491 = vmatprep.subr.bf16.mxu0 0
        %492 = vmatpush1.bf16.msra.mxu0 0
        %493 = vmatprep.mubr.bf16.mxu0 0
        %494 = vmatmul.mubr.bf16.gmra.mrb[0].mxu0 %v459
        %v495 = vpop.f32.mrb[0].mxu0
        %v496 = vadd.f32 0.0, %v495
        %v497 = vpop.f32.mrb[0].mxu0
        %v498 = vpop.f32.mrb[0].mxu0
        %v499 = vadd.f32 0.0, %v498
        %v500 = vpop.f32.mrb[0].mxu0
        %501 = vdwg.mxu0
        %v502 = vadd.f32 %v423, %v496
        %v503 = vadd.f32 %v424, %v499
        %504 = vst [vmem:[#allocation2] sm:$0xff] %v502
        %505 = vst [vmem:[#allocation2 + $0x8] sm:$0xff] %v503
        %s506 = sld [smem:[#allocation7 + %s41]]
        %p507 = scmp.eq.s32.totalorder %s506, 1
        // Predicated region
        $region61: #{tpu_custom_call.1} parent=47 // pred_check
          %p508 = pneg %p507
        $region62: #{tpu_custom_call.1} parent=47 // pred_check_branch
          %510 = sbr.rel (%p508) target = $region64
        $region63: #{tpu_custom_call.1} parent=47 // pred_region
          %v511 = vld [vmem:[#allocation2] sm:$0xff]
          %v512 = vld [vmem:[#allocation2 + $0x8] sm:$0xff]
          %v513 = vld [vmem:[%s386] sm:$0xff]
          %v514 = vld [vmem:[%s386 + $0x8] sm:$0xff]
          %516 = vset.pattern.permute.xlu0 0
          %517 = vperm.xlu0 %516, %v513
          %v518 = vpop.permute.xlu0 %517
          %521 = vset.pattern.permute.xlu0 0
          %522 = vperm.xlu0 %521, %v514
          %v523 = vpop.permute.xlu0 %522
          %v525 = vmul.f32 %v511, %v518
          %v526 = vmul.f32 %v512, %v523
          %v527 = vld [vmem:[%s378] sm:$0xf]
          %v528 = vld [vmem:[%s378 + $0x4] sm:$0xf]
          %v529 = vld [vmem:[%s7] sm:$0xf]
          %v530 = vld [vmem:[%s7 + $0x4] sm:$0xf]
          %v531 = vpack.c.bf16 %v526, %v525
          %v532 = vld [vmem:[%s8] sm:$0xf]
          %v533 = vld [vmem:[%s8 + $0x4] sm:$0xf]
          %v534 = vld [vmem:[%s8 + $0x8] sm:$0xf]
          %v535 = vld [vmem:[%s8 + $0xc] sm:$0xf]
          %v536 = vld [vmem:[%s8 + $0x10] sm:$0xf]
          %v537 = vld [vmem:[%s8 + $0x14] sm:$0xf]
          %v538 = vld [vmem:[%s8 + $0x18] sm:$0xf]
          %v539 = vld [vmem:[%s8 + $0x1c] sm:$0xf]
          %v540 = vld [vmem:[%s8 + $0x20] sm:$0xf]
          %v541 = vld [vmem:[%s8 + $0x24] sm:$0xf]
          %v542 = vld [vmem:[%s8 + $0x28] sm:$0xf]
          %v543 = vld [vmem:[%s8 + $0x2c] sm:$0xf]
          %v544 = vld [vmem:[%s8 + $0x30] sm:$0xf]
          %v545 = vld [vmem:[%s8 + $0x34] sm:$0xf]
          %v546 = vld [vmem:[%s8 + $0x38] sm:$0xf]
          %v547 = vld [vmem:[%s8 + $0x3c] sm:$0xf]
          %v564 = vunpack.c.l.b16 %v532
          %v565 = vunpack.c.l.b16 %v533
          %v566 = vunpack.c.l.b16 %v534
          %v567 = vunpack.c.l.b16 %v535
          %v568 = vunpack.c.l.b16 %v536
          %v569 = vunpack.c.l.b16 %v537
          %v570 = vunpack.c.l.b16 %v538
          %v571 = vunpack.c.l.b16 %v539
          %v572 = vunpack.c.l.b16 %v540
          %v573 = vunpack.c.l.b16 %v541
          %v574 = vunpack.c.l.b16 %v542
          %v575 = vunpack.c.l.b16 %v543
          %v576 = vunpack.c.l.b16 %v544
          %v577 = vunpack.c.l.b16 %v545
          %v578 = vunpack.c.l.b16 %v546
          %v579 = vunpack.c.l.b16 %v547
          %v580 = vpack.c.b16 %v565, %v564
          %v581 = vpack.c.b16 %v567, %v566
          %v582 = vpack.c.b16 %v569, %v568
          %v583 = vpack.c.b16 %v571, %v570
          %v584 = vpack.c.b16 %v573, %v572
          %v585 = vpack.c.b16 %v575, %v574
          %v586 = vpack.c.b16 %v577, %v576
          %v587 = vpack.c.b16 %v579, %v578
          %596 = vmatprep.subr.bf16.mxu0 0
          %597 = vmatpush1.bf16.msra.mxu0 %v580
          %598 = vmatprep.subr.bf16.mxu0 0
          %599 = vmatpush1.bf16.msra.mxu0 %v581
          %600 = vmatprep.subr.bf16.mxu0 0
          %601 = vmatpush1.bf16.msra.mxu0 %v582
          %602 = vmatprep.subr.bf16.mxu0 0
          %603 = vmatpush1.bf16.msra.mxu0 %v583
          %604 = vmatprep.subr.bf16.mxu0 0
          %605 = vmatpush1.bf16.msra.mxu0 %v584
          %606 = vmatprep.subr.bf16.mxu0 0
          %607 = vmatpush1.bf16.msra.mxu0 %v585
          %608 = vmatprep.subr.bf16.mxu0 0
          %609 = vmatpush1.bf16.msra.mxu0 %v586
          %610 = vmatprep.subr.bf16.mxu0 0
          %611 = vmatpush1.bf16.msra.mxu0 %v587
          %612 = vmatprep.subr.bf16.mxu0 0
          %613 = vmatpush1.bf16.msra.mxu0 0
          %614 = vmatprep.subr.bf16.mxu0 0
          %615 = vmatpush1.bf16.msra.mxu0 0
          %616 = vmatprep.subr.bf16.mxu0 0
          %617 = vmatpush1.bf16.msra.mxu0 0
          %618 = vmatprep.subr.bf16.mxu0 0
          %619 = vmatpush1.bf16.msra.mxu0 0
          %620 = vmatprep.subr.bf16.mxu0 0
          %621 = vmatpush1.bf16.msra.mxu0 0
          %622 = vmatprep.subr.bf16.mxu0 0
          %623 = vmatpush1.bf16.msra.mxu0 0
          %624 = vmatprep.subr.bf16.mxu0 0
          %625 = vmatpush1.bf16.msra.mxu0 0
          %626 = vmatprep.subr.bf16.mxu0 0
          %627 = vmatpush1.bf16.msra.mxu0 0
          %628 = vmatprep.mubr.bf16.mxu0 0
          %629 = vmatmul.mubr.bf16.gmra.mrb[0].mxu0 %v531
          %v630 = vpop.f32.mrb[0].mxu0
          %v631 = vadd.f32 0.0, %v630
          %v632 = vpop.f32.mrb[0].mxu0
          %v633 = vpop.f32.mrb[0].mxu0
          %v634 = vadd.f32 0.0, %v633
          %v635 = vpop.f32.mrb[0].mxu0
          %636 = vdwg.mxu0
          %v639 = vunpack.c.l.b16 %v527
          %v640 = vunpack.c.l.b16 %v528
          %v641 = vpack.c.b16 %v640, %v639
          %v644 = vunpack.c.l.b16 %v529
          %v645 = vunpack.c.l.b16 %v530
          %v646 = vpack.c.b16 %v645, %v644
          %vm648 = vcmask 130048
          %v650 = vsel %vm648, %v641, 0
          %652 = vmatprep.subr.bf16.mxu0 0
          %653 = vmatpush1.bf16.msra.mxu0 %v646
          %654 = vmatprep.subr.bf16.mxu0 0
          %655 = vmatpush1.bf16.msra.mxu0 0
          %656 = vmatprep.subr.bf16.mxu0 0
          %657 = vmatpush1.bf16.msra.mxu0 0
          %658 = vmatprep.subr.bf16.mxu0 0
          %659 = vmatpush1.bf16.msra.mxu0 0
          %660 = vmatprep.subr.bf16.mxu0 0
          %661 = vmatpush1.bf16.msra.mxu0 0
          %662 = vmatprep.subr.bf16.mxu0 0
          %663 = vmatpush1.bf16.msra.mxu0 0
          %664 = vmatprep.subr.bf16.mxu0 0
          %665 = vmatpush1.bf16.msra.mxu0 0
          %666 = vmatprep.subr.bf16.mxu0 0
          %667 = vmatpush1.bf16.msra.mxu0 0
          %668 = vmatprep.subr.bf16.mxu0 0
          %669 = vmatpush1.bf16.msra.mxu0 0
          %670 = vmatprep.subr.bf16.mxu0 0
          %671 = vmatpush1.bf16.msra.mxu0 0
          %672 = vmatprep.subr.bf16.mxu0 0
          %673 = vmatpush1.bf16.msra.mxu0 0
          %674 = vmatprep.subr.bf16.mxu0 0
          %675 = vmatpush1.bf16.msra.mxu0 0
          %676 = vmatprep.subr.bf16.mxu0 0
          %677 = vmatpush1.bf16.msra.mxu0 0
          %678 = vmatprep.subr.bf16.mxu0 0
          %679 = vmatpush1.bf16.msra.mxu0 0
          %680 = vmatprep.subr.bf16.mxu0 0
          %681 = vmatpush1.bf16.msra.mxu0 0
          %682 = vmatprep.subr.bf16.mxu0 0
          %683 = vmatpush1.bf16.msra.mxu0 0
          %684 = vmatprep.mubr.bf16.mxu0 0
          %685 = vmatmul.mubr.bf16.gmra.mrb[0].mxu0 %v650
          %v686 = vpop.f32.mrb[0].mxu0
          %v687 = vadd.f32 %v631, %v686
          %v688 = vpop.f32.mrb[0].mxu0
          %v689 = vpop.f32.mrb[0].mxu0
          %v690 = vadd.f32 %v634, %v689
          %v691 = vpop.f32.mrb[0].mxu0
          %692 = vdwg.mxu0
          %v693 = vld [vmem:[%s9] sm:$0x1]
          %v695 = vlaneseq
          %v696 = vshrl.u32 %v695, 7
          %v697 = vsub.s32 0, %v696
          %v698 = vrot.slane %v693, %v697
          %v700 = vadd.f32 %v687, %v698
          %v701 = vadd.f32 %v690, %v698
          %v702 = vmax.f32 %v700, 0.0
          %v703 = vmax.f32 %v701, 0.0
          %v704 = vpack.c.bf16 %v703, %v702
          %v706 = vunpack.c.l.b16 %v704
          %v707 = vunpack.c.h.b16 %v704
          %v708 = vpack.c.b16 %v706, %v706
          %v709 = vpack.c.b16 %v707, %v707
          %712 = vst [vmem:[%s368] sm:$0xf] %v708
          %713 = vst [vmem:[%s368 + $0x4] sm:$0xf] %v709
        $region64: #{tpu_custom_call.1} parent=47 // pred_fallthru
          _
        %s714 = sand.u32 %s222, 1
        %s715 = scalar_lea.sflag [#allocation10], %s714
        %s716 = sand.u32 %s222, 1
        %s717 = smul.addr %s716, 8
        %s718 = scalar_lea.vmem [#allocation11], %s717
        // Predicated region
        $region65: #{tpu_custom_call.1} parent=47 // pred_check
          %p719 = pneg %p232
        $region66: #{tpu_custom_call.1} parent=47 // pred_check_branch
          %721 = sbr.rel (%p719) target = $region68
        $region67: #{tpu_custom_call.1} parent=47 // pred_region
          %s722 = sld [smem:[#allocation5 + %s41]]
          %s723 = smul.u32 2, %s722
          %s725 = ssub.s32 128, 128
          %726 = vsyncadd %s715, %s725
          %s727 = smul.addr %s723, 64
          %s728 = scalar_lea.hbm %s10, %s727
          %s729 = sshll.u32 %s718, 4
          %s730 = int_to_ptr.vmem [resolvable:$true] %s729
          %735 = dma.vmem_to_hbm [thread:$0]  %s730, 128, %s728, %s715, 64, 64, 4
        $region68: #{tpu_custom_call.1} parent=47 // pred_fallthru
          _
      $region48: #{tpu_custom_call.1} parent=5 // pred_fallthru
        _
      %p736 = scmp.le.s32.totalorder 2, %s36
      // Predicated region
      $region69: #{tpu_custom_call.1} parent=5 // pred_check
        %p737 = pneg %p736
      $region70: #{tpu_custom_call.1} parent=5 // pred_check_branch
        %739 = sbr.rel (%p737) target = $region72
      $region71: #{tpu_custom_call.1} parent=5 // pred_region
        %s740 = ssub.s32 %s36, 2
        // Predicated region
        $region73: #{tpu_custom_call.1} parent=71 // pred_check
          %p741 = pneg %p238
        $region74: #{tpu_custom_call.1} parent=71 // pred_check_branch
          %743 = sbr.rel (%p741) target = $region76
        $region75: #{tpu_custom_call.1} parent=71 // pred_region
          %s744 = sand.u32 %s223, 1
          %s745 = scalar_lea.sflag [#allocation10], %s744
          %s746 = sand.u32 %s223, 1
          %s747 = smul.addr %s746, 8
          %s748 = scalar_lea.vmem [#allocation11], %s747
          %749 = dma.done %s745, 128
        $region76: #{tpu_custom_call.1} parent=71 // pred_fallthru
          _
      $region72: #{tpu_custom_call.1} parent=5 // pred_fallthru
        _
    $region6: #{tpu_custom_call.1} parent=1 // loop_footer
      %s40 = sadd.s32 1, %s36
    $region7: #{tpu_custom_call.1} parent=1 // loop_footer_branch
      %35 = sbr.rel target = $region3
    $region8: #{tpu_custom_call.1} parent=1 // loop_exit
      _
    %750 = vsyncpa [#allocation9], 1
    %s751 = scalar_lea.sflag [#allocation9], 1
    %752 = vsyncpa %s751, 1
    %753 = vsyncpa [#allocation10], 1
    %s754 = scalar_lea.sflag [#allocation10], 1
    %755 = vsyncpa %s754, 1

</llo_original>
